<compile_context>
chip_gen: v6e
topology: v6e:2x2x1
jax: 0.10.0
libtpu: 0.0.40
codegen_flags: <defaults>
</compile_context>

<pallas_src>
import functools

import jax
import jax.numpy as jnp
from jax.experimental import pallas as pl
from jax.experimental.pallas import tpu as pltpu


# ----------------------------------------------------------------------------
# Dropout kernel: stateless counter hash -> keep mask -> masked scale.
# ----------------------------------------------------------------------------
def _dropout_kernel(seed_ref, x_ref, o_ref, *, thresh, scale,
                    block_rows, block_cols):
    shape = x_ref.shape
    r0 = pl.program_id(0) * block_rows
    c0 = pl.program_id(1) * block_cols
    rows = (jax.lax.broadcasted_iota(jnp.int32, shape, 0) + r0).astype(jnp.uint32)
    cols = (jax.lax.broadcasted_iota(jnp.int32, shape, 1) + c0).astype(jnp.uint32)
    seed = seed_ref[0].astype(jnp.uint32)

    # Stateless counter-based hash (lowbias32-style finalizer).  Pure VPU
    # integer ops; the kernel is HBM-bound so this work is hidden.
    h = rows * jnp.uint32(0x9E3779B1) + cols * jnp.uint32(0x85EBCA77)
    h = h ^ (seed * jnp.uint32(0x27D4EB2F))
    h = h ^ (h >> 16)
    h = h * jnp.uint32(0x7FEB352D)
    h = h ^ (h >> 15)
    h = h * jnp.uint32(0x846CA68B)
    h = h ^ (h >> 16)

    # Integer threshold compare: top 23 bits uniform in [0, 2^23),
    # P(keep) = 1 - p.  No int->float convert, no extra f32 multiply.
    keep = (h >> 9) >= jnp.uint32(thresh)
    xv = x_ref[...]
    o_ref[...] = jnp.where(keep, xv * scale, 0.0).astype(o_ref.dtype)


def _pick_block(E, F, itemsize, target_bytes=2 << 20):
    """Block sizing by VMEM byte budget (double-buffered in+out ~ 4x block)."""
    # Column tile: keep the full feature dim unless it is a huge multiple of
    # 128 (then tile lane-dense so block bytes stay bounded, esp. on v7x).
    if F % 128 == 0 and F * itemsize > target_bytes:
        bc = max(128, (target_bytes // itemsize) // 128 * 128)
    else:
        bc = F
    # Row tile: fill the byte budget, multiple of 8 sublanes.
    br = max(8, (target_bytes // max(1, bc * itemsize)) // 8 * 8)
    # Guarantee >= 2 row blocks (when E allows) so both v7x TCs stream.
    if E >= 16:
        half = (((E + 1) // 2) + 7) // 8 * 8
        br = min(br, half)
    if br >= E:
        br = E  # full-dim block is always layout-legal
    return int(br), int(bc)


def graph_dropout_features(features, seed, *, p=0.5, training=True):
    """nn.Dropout(p) applied to an [E, F] feature matrix."""
    if not training or p == 0.0:
        return features                      # eval mode / p=0: identity
    if p >= 1.0:
        return jnp.zeros_like(features)      # nn.Dropout(p=1): all zeros

    E, F = features.shape
    itemsize = jnp.dtype(features.dtype).itemsize
    br, bc = _pick_block(E, F, itemsize)
    grid = (pl.cdiv(E, br), pl.cdiv(F, bc))

    kernel = functools.partial(
        _dropout_kernel,
        thresh=int(round(float(p) * (1 << 23))),
        scale=1.0 / (1.0 - float(p)),
        block_rows=br, block_cols=bc)

    return pl.pallas_call(
        kernel,
        out_shape=jax.ShapeDtypeStruct((E, F), features.dtype),
        grid_spec=pltpu.PrefetchScalarGridSpec(
            num_scalar_prefetch=1,                       # seed -> SMEM
            grid=grid,
            in_specs=[pl.BlockSpec((br, bc), lambda i, j, seed: (i, j))],
            out_specs=pl.BlockSpec((br, bc), lambda i, j, seed: (i, j)),
        ),
        compiler_params=pltpu.CompilerParams(
            dimension_semantics=("parallel", "parallel")),
        # features (operand 1; seed is operand 0) aliased to the output:
        # in-place set_features semantics, no second E*F HBM buffer.
        input_output_aliases={1: 0},
        cost_estimate=pl.CostEstimate(
            flops=E * F, transcendentals=0,
            bytes_accessed=2 * E * F * itemsize),
    )(jnp.asarray([seed], jnp.int32), features)


def graph_dropout(graph, seed, *, p=0.5, training=True):
    """GraphDropout.forward: dropout on features, set back into the graph."""
    # TODO(synk): the Graph container (get_features/set_features) is modeled
    # as a plain dict; only the feature tensor exists on-device.
    # TODO(synk): biggest end-to-end win is fusing this mask into the
    # producer/consumer kernel of `features` (avoids a full extra HBM sweep).
    new_feats = graph_dropout_features(
        graph["features"], seed, p=p, training=training)
    out = dict(graph)
    out["features"] = new_feats
    return out


if __name__ == "__main__":
    key = jax.random.PRNGKey(0)

    # Small shapes consistent with the module: E entities x F features.
    E, F = 128, 256
    P = 0.5
    features = jax.random.normal(key, (E, F), jnp.float32)
    graph = {"features": features}

    # Reference (computed before the kernel call).
    scaled_ref = features * (1.0 / (1.0 - P))

    # --- training mode: run the Pallas dropout kernel ------------------------
    out_graph = graph_dropout(graph, seed=1234, p=P, training=True)
    out = jax.block_until_ready(out_graph["features"])
    assert out.shape == (E, F)

    # Semantics check: every output element is either 0 (dropped) or
    # x / (1 - p) (kept, scaled), exactly as nn.Dropout in train mode.
    is_zero = out == 0.0
    is_scaled = jnp.abs(out - scaled_ref) <= 1e-5 * (1.0 + jnp.abs(scaled_ref))
    assert bool(jnp.all(is_zero | is_scaled)), "output must be 0 or x/(1-p)"

    # Keep rate should be roughly 1 - p.
    keep_frac = float(jnp.mean((~is_zero).astype(jnp.float32)))
    assert abs(keep_frac - (1.0 - P)) < 0.05, keep_frac

    # Determinism: same seed -> same mask.
    out2 = jax.block_until_ready(
        graph_dropout(graph, seed=1234, p=P, training=True)["features"])
    assert bool(jnp.all(out == out2)), "dropout must be deterministic per seed"

    # --- eval mode: identity --------------------------------------------------
    eval_out = graph_dropout(graph, seed=1234, p=P, training=False)["features"]
    assert bool(jnp.all(eval_out == features)), "eval mode must be identity"

    print("KERNEL_OK")
</pallas_src>

<mosaic_0001>
module attributes {stable_mosaic.version = 11 : i64} {
  func.func @_dropout_kernel(%arg0: i32, %arg1: i32, %arg2: memref<1xi32, #tpu.memory_space<smem>>, %arg3: memref<64x256xf32, #tpu.memory_space<vmem>>, %arg4: memref<64x256xf32, #tpu.memory_space<vmem>>) attributes {dimension_semantics = [#tpu.dimension_semantics<parallel>, #tpu.dimension_semantics<parallel>], iteration_bounds = array<i64: 2, 1>, scalar_prefetch = 1 : i64, scratch_operands = 0 : i64, tpu.core_type = #tpu.core_type<tc>, window_params = [{transform_indices = @transform_0, window_bounds = array<i64: 64, 256>}, {transform_indices = @transform_1, window_bounds = array<i64: 64, 256>}]} {
    %c64_i32 = arith.constant 64 : i32
    %0 = arith.muli %arg0, %c64_i32 : i32
    %c256_i32 = arith.constant 256 : i32
    %1 = arith.muli %arg1, %c256_i32 : i32
    %2 = tpu.iota {dimensions = array<i32: 0>} : vector<64x256xi32>
    %3 = vector.broadcast %0 : i32 to vector<64x256xi32>
    %4 = arith.addi %2, %3 : vector<64x256xi32>
    %5 = tpu.iota {dimensions = array<i32: 1>} : vector<64x256xi32>
    %6 = vector.broadcast %1 : i32 to vector<64x256xi32>
    %7 = arith.addi %5, %6 : vector<64x256xi32>
    %c0 = arith.constant 0 : index
    %8 = memref.load %arg2[%c0] : memref<1xi32, #tpu.memory_space<smem>>
    %c-1640531535_i32 = arith.constant -1640531535 : i32
    %9 = vector.broadcast %c-1640531535_i32 : i32 to vector<64x256xi32>
    %10 = arith.muli %4, %9 : vector<64x256xi32>
    %c-2048144777_i32 = arith.constant -2048144777 : i32
    %11 = vector.broadcast %c-2048144777_i32 : i32 to vector<64x256xi32>
    %12 = arith.muli %7, %11 : vector<64x256xi32>
    %13 = arith.addi %10, %12 : vector<64x256xi32>
    %c668265263_i32 = arith.constant 668265263 : i32
    %14 = arith.muli %8, %c668265263_i32 : i32
    %15 = vector.broadcast %14 : i32 to vector<64x256xi32>
    %16 = arith.xori %13, %15 : vector<64x256xi32>
    %c16_i32 = arith.constant 16 : i32
    %17 = vector.broadcast %c16_i32 : i32 to vector<64x256xi32>
    %18 = arith.shrui %16, %17 : vector<64x256xi32>
    %19 = arith.xori %16, %18 : vector<64x256xi32>
    %c2146121005_i32 = arith.constant 2146121005 : i32
    %20 = vector.broadcast %c2146121005_i32 : i32 to vector<64x256xi32>
    %21 = arith.muli %19, %20 : vector<64x256xi32>
    %c15_i32 = arith.constant 15 : i32
    %22 = vector.broadcast %c15_i32 : i32 to vector<64x256xi32>
    %23 = arith.shrui %21, %22 : vector<64x256xi32>
    %24 = arith.xori %21, %23 : vector<64x256xi32>
    %c-2073254261_i32 = arith.constant -2073254261 : i32
    %25 = vector.broadcast %c-2073254261_i32 : i32 to vector<64x256xi32>
    %26 = arith.muli %24, %25 : vector<64x256xi32>
    %c16_i32_0 = arith.constant 16 : i32
    %27 = vector.broadcast %c16_i32_0 : i32 to vector<64x256xi32>
    %28 = arith.shrui %26, %27 : vector<64x256xi32>
    %29 = arith.xori %26, %28 : vector<64x256xi32>
    %c9_i32 = arith.constant 9 : i32
    %30 = vector.broadcast %c9_i32 : i32 to vector<64x256xi32>
    %31 = arith.shrui %29, %30 : vector<64x256xi32>
    %c4194304_i32 = arith.constant 4194304 : i32
    %32 = vector.broadcast %c4194304_i32 : i32 to vector<64x256xi32>
    %33 = arith.cmpi uge, %31, %32 : vector<64x256xi32>
    %c0_1 = arith.constant 0 : index
    %c0_2 = arith.constant 0 : index
    %34 = vector.load %arg3[%c0_1, %c0_2] : memref<64x256xf32, #tpu.memory_space<vmem>>, vector<64x256xf32>
    %cst = arith.constant 2.000000e+00 : f32
    %35 = vector.broadcast %cst : f32 to vector<64x256xf32>
    %36 = arith.mulf %34, %35 : vector<64x256xf32>
    %cst_3 = arith.constant 0.000000e+00 : f32
    %37 = vector.broadcast %cst_3 : f32 to vector<64x256xf32>
    %38 = arith.select %33, %36, %37 : vector<64x256xi1>, vector<64x256xf32>
    %c0_4 = arith.constant 0 : index
    %c0_5 = arith.constant 0 : index
    %39 = vector.load %arg4[%c0_4, %c0_5] : memref<64x256xf32, #tpu.memory_space<vmem>>, vector<64x256xf32>
    tpu.vector_store %arg4[%c0_4, %c0_5], %38 {strides = array<i32>} : memref<64x256xf32, #tpu.memory_space<vmem>>, vector<64x256xf32>,
    return
  }
  func.func @transform_0(%arg0: i32, %arg1: i32, %arg2: memref<1xi32, #tpu.memory_space<smem>>) -> (i32, i32) {
    %c0_i32 = arith.constant 0 : i32
    return %arg0, %arg1 : i32, i32
  }
  func.func @transform_1(%arg0: i32, %arg1: i32, %arg2: memref<1xi32, #tpu.memory_space<smem>>) -> (i32, i32) {
    %c0_i32 = arith.constant 0 : i32
    return %arg0, %arg1 : i32, i32
  }
}

</mosaic_0001>

<llo_original>
// kernel: tpu_custom_call.1
$region0: #{tpu_custom_call.1}
  #allocation0 [shape = 'u32[]', space=smem, size = 0x4, offset = 0x4, fixed_abs, tag = 'smem constant byte address 0x4 - core index']
  #allocation1 [shape = 'u32[144,128]{1,0:T(1,128)}', space=vmem, size = 0x12000, scoped, tag = 'internal scratch']
  #allocation2 [shape = 's32[1]{0}', space=sflag, size = 0x4, scoped, tag = 'scoped memory for tpu_custom_call.1']
  #allocation3 [shape = 's32[1]{0:T(128)S(6)}', space=smem, size = 0x200, scoped, tag = 'prefetched SMEM operand 0']
  %s0 = inlined_call_operand.<no memory space> [shape: s32[1], index: 0, kind: input, shape index: {}]
  %s1 = inlined_call_operand.hbm [shape: f32[128,256], index: 1, kind: input, shape index: {}, may-alias: {1,2}]
  %s2 = inlined_call_operand.hbm [shape: f32[128,256], index: 2, kind: output, shape index: {}, may-alias: {1,2}]
  %s3 = sld [smem:[#allocation0]]
  $region41: #{tpu_custom_call.1} parent=0
    _
  %s5 = ssub.s32 1, %s3
  %s6 = scalar_select 0, %s5, %s3
  %7 = sst [smem:[#allocation3]] %s0
  $region1: #{tpu_custom_call.1} parent=0
    #allocation4 [shape = 'u8[131072]{0}', space=vmem, size = 0x20000, scoped, tag = 'input window, operand 1']
    #allocation5 [shape = 's32[2]{0}', space=sflag, size = 0x8, scoped, tag = 'scoped memory for tpu_custom_call.1']
    #allocation6 [shape = 's32[2]{0}', space=sflag, size = 0x8, scoped, tag = 'scoped memory for tpu_custom_call.1']
    #allocation7 [shape = 'u8[131072]{0}', space=vmem, size = 0x20000, scoped, tag = 'output window, operand 0']
    %8 = vsyncpa [#allocation5], 0
    %s9 = scalar_lea.sflag [#allocation5], 1
    %10 = vsyncpa %s9, 0
    %11 = vsyncpa [#allocation6], 0
    %s12 = scalar_lea.sflag [#allocation6], 1
    %13 = vsyncpa %s12, 0
    loop: start=0, step=1, limit=4
    $region2: #{tpu_custom_call.1} parent=1 // loop_pre_header
      _
    $region3: #{tpu_custom_call.1} parent=1 // loop_header
      %s15 = sphi 0, %s19
      %p16 = scmp.ge.s32.totalorder %s15, 4
      %s22 = sphi 0, %s34
      %s23 = sphi 0, %s30
      %s24 = sphi 0, %s22
      %s25 = sphi 0, %s23
      %s26 = sphi 0, %s24
      %s27 = sphi 0, %s25
      %s39 = sphi 0, %s41
      %s42 = sphi 0, %s39
      %s43 = sphi 0, %s42
      %s59 = sphi 0, %s43
      %s67 = sphi 0, %s69
      %s70 = sphi 0, %s67
      %s71 = sphi 0, %s70
      %s87 = sphi 0, %s71
    $region4: #{tpu_custom_call.1} parent=1 // loop_header_branch
      %18 = sbr.rel (%p16) target = $region8
    $region5: #{tpu_custom_call.1} parent=1 // loop_body
      %s20 = ssub.s32 %s15, 1
      %s21 = ssub.s32 %s15, 2
      %s28 = sadd.s32 1, %s23
      %p29 = scmp.ge.s32.totalorder %s28, 1
      %s30 = scalar_select %p29, 0, %s28
      %s31 = sadd.s32 1, %s22
      %s32 = scalar_select %p29, %s31, %s22
      %p33 = scmp.ge.s32.totalorder %s32, 2
      %s34 = scalar_select %p33, 0, %s32
      %s35 = ssub.s32 %s22, %s34
      %s36 = ssub.s32 %s23, %s30
      %s37 = sor.u32 %s35, %s36
      %p38 = scmp.eq.s32.totalorder %s37, 0
      %s40 = sadd.s32 %s39, 1
      %s41 = scalar_select %p38, %s39, %s40
      %p44 = pneg %p38
      %p45 = scmp.eq.s32.totalorder %s15, 1
      %p46 = por %p44, %p45
      %p47 = scmp.ne.s32.totalorder %s39, %s42
      %p48 = scmp.eq.s32.totalorder %s15, 0
      %p49 = por %p47, %p48
      %p50 = scmp.ne.s32.totalorder %s39, %s42
      %p51 = scmp.eq.s32.totalorder %s20, 1
      %p52 = por %p50, %p51
      %p53 = scmp.ne.s32.totalorder %s42, %s43
      %p54 = scmp.eq.s32.totalorder %s20, 0
      %p55 = por %p53, %p54
      %p56 = scmp.ne.s32.totalorder %s42, %s43
      %p57 = scmp.eq.s32.totalorder %s21, 1
      %p58 = por %p56, %p57
      %p60 = scmp.ne.s32.totalorder %s43, %s59
      %p61 = scmp.eq.s32.totalorder %s21, 0
      %p62 = por %p60, %p61
      %s63 = ssub.s32 %s22, %s34
      %s64 = ssub.s32 %s23, %s30
      %s65 = sor.u32 %s63, %s64
      %p66 = scmp.eq.s32.totalorder %s65, 0
      %s68 = sadd.s32 %s67, 1
      %s69 = scalar_select %p66, %s67, %s68
      %p72 = pneg %p66
      %p73 = scmp.eq.s32.totalorder %s15, 1
      %p74 = por %p72, %p73
      %p75 = scmp.ne.s32.totalorder %s67, %s70
      %p76 = scmp.eq.s32.totalorder %s15, 0
      %p77 = por %p75, %p76
      %p78 = scmp.ne.s32.totalorder %s67, %s70
      %p79 = scmp.eq.s32.totalorder %s20, 1
      %p80 = por %p78, %p79
      %p81 = scmp.ne.s32.totalorder %s70, %s71
      %p82 = scmp.eq.s32.totalorder %s20, 0
      %p83 = por %p81, %p82
      %p84 = scmp.ne.s32.totalorder %s70, %s71
      %p85 = scmp.eq.s32.totalorder %s21, 1
      %p86 = por %p84, %p85
      %p88 = scmp.ne.s32.totalorder %s71, %s87
      %p89 = scmp.eq.s32.totalorder %s21, 0
      %p90 = por %p88, %p89
      %p91 = scmp.le.s32.totalorder 1, %s15
      %p92 = scmp.lt.s32.totalorder %s15, 3
      %p93 = pnand %p91, %p92
      %p94 = pneg %p93
      // Predicated region
      $region9: #{tpu_custom_call.1} parent=5 // pred_check
        _
      $region10: #{tpu_custom_call.1} parent=5 // pred_check_branch
        %96 = sbr.rel (%p93) target = $region12
      $region11: #{tpu_custom_call.1} parent=5 // pred_region
        %s97 = ssub.s32 %s15, 1
      $region12: #{tpu_custom_call.1} parent=5 // pred_fallthru
        _
      %p98 = scmp.lt.s32.totalorder %s15, 2
      // Predicated region
      $region13: #{tpu_custom_call.1} parent=5 // pred_check
        %p99 = pneg %p98
      $region14: #{tpu_custom_call.1} parent=5 // pred_check_branch
        %101 = sbr.rel (%p99) target = $region16
      $region15: #{tpu_custom_call.1} parent=5 // pred_region
        // Predicated region
        $region17: #{tpu_custom_call.1} parent=15 // pred_check
          %p102 = pneg %p49
        $region18: #{tpu_custom_call.1} parent=15 // pred_check_branch
          %104 = sbr.rel (%p102) target = $region20
        $region19: #{tpu_custom_call.1} parent=15 // pred_region
          %s105 = sand.u32 %s39, 1
          %s106 = scalar_lea.sflag [#allocation5], %s105
          %s107 = sand.u32 %s39, 1
          %s108 = smul.addr %s107, 128
          %s109 = scalar_lea.vmem [#allocation4], %s108
          %s110 = smul.u32 8, %s22
          %s111 = smul.u32 2, %s23
          %s113 = ssub.s32 2048, 2048
          %114 = vsyncadd %s106, %s113
          %s115 = smul.addr %s110, 2
          %s116 = sadd.s32 %s111, %s115
          %s117 = smul.addr %s116, 128
          %s118 = scalar_lea.hbm %s1, %s117
          %s119 = sshll.u32 %s109, 4
          %s120 = int_to_ptr.vmem [resolvable:$true] %s119
          %125 = dma.hbm_to_vmem [thread:$0]  %s118, 2048, %s120, %s106, 256, 256, 16
        $region20: #{tpu_custom_call.1} parent=15 // pred_fallthru
          _
      $region16: #{tpu_custom_call.1} parent=5 // pred_fallthru
        _
      %p126 = scmp.le.s32.totalorder 1, %s15
      %p127 = scmp.lt.s32.totalorder %s15, 3
      %p128 = pnand %p126, %p127
      %p129 = pneg %p128
      // Predicated region
      $region21: #{tpu_custom_call.1} parent=5 // pred_check
        _
      $region22: #{tpu_custom_call.1} parent=5 // pred_check_branch
        %131 = sbr.rel (%p128) target = $region24
      $region23: #{tpu_custom_call.1} parent=5 // pred_region
        %s132 = ssub.s32 %s15, 1
        %s133 = sand.u32 %s42, 1
        %s134 = scalar_lea.sflag [#allocation5], %s133
        %s135 = sand.u32 %s42, 1
        %s136 = smul.addr %s135, 128
        %s137 = scalar_lea.vmem [#allocation4], %s136
        // Predicated region
        $region25: #{tpu_custom_call.1} parent=23 // pred_check
          %p138 = pneg %p55
        $region26: #{tpu_custom_call.1} parent=23 // pred_check_branch
          %140 = sbr.rel (%p138) target = $region28
        $region27: #{tpu_custom_call.1} parent=23 // pred_region
          %141 = dma.done %s134, 2048
        $region28: #{tpu_custom_call.1} parent=23 // pred_fallthru
          _
        %s142 = sand.u32 %s42, 1
        %s143 = scalar_lea.sflag [#allocation5], %s142
        %s144 = sand.u32 %s42, 1
        %s145 = smul.addr %s144, 128
        %s146 = scalar_lea.vmem [#allocation4], %s145
        %p147 = pneg %p55
        %p148 = pneg %p52
        %p149 = pneg %p83
        %p150 = pneg %p80
        %s151 = sand.u32 %s70, 1
        %s152 = scalar_lea.sflag [#allocation6], %s151
        %s153 = sand.u32 %s70, 1
        %s154 = smul.addr %s153, 128
        %s155 = scalar_lea.vmem [#allocation7], %s154
        %s156 = smul.u32 8, %s24
        %s157 = smul.u32 2, %s25
        %s158 = smul.u32 8, %s24
        %s159 = smul.u32 2, %s25
        %s160 = smul.u32 %s24, 64
        %s161 = smul.u32 %s25, 256
        %v162 = vlaneseq
        %v163 = vshrl.u32 %v162, 7
        %v164 = vadd.s32 %v163, 8
        %v165 = vadd.s32 %v163, 16
        %v166 = vadd.s32 %v163, 24
        %v167 = vadd.s32 %v163, 32
        %v168 = vadd.s32 %v163, 40
        %v169 = vadd.s32 %v163, 48
        %v170 = vadd.s32 %v163, 56
        %v171 = vstv %s160
        %v172 = vadd.s32 %v163, %v171
        %v173 = vadd.s32 %v164, %v171
        %v174 = vadd.s32 %v165, %v171
        %v175 = vadd.s32 %v166, %v171
        %v176 = vadd.s32 %v167, %v171
        %v177 = vadd.s32 %v168, %v171
        %v178 = vadd.s32 %v169, %v171
        %v179 = vadd.s32 %v170, %v171
        %v180 = vlaneseq
        %v181 = vand.u32 %v180, 127
        %v182 = vadd.s32 %v181, 128
        %v183 = vstv %s161
        %v184 = vadd.s32 %v181, %v183
        %v185 = vadd.s32 %v182, %v183
        %s186 = sld [smem:[#allocation3]]
        %v187 = vmul.u32 %v172, 2654435761
        %v188 = vmul.u32 %v173, 2654435761
        %v189 = vmul.u32 %v174, 2654435761
        %v190 = vmul.u32 %v175, 2654435761
        %v191 = vmul.u32 %v176, 2654435761
        %v192 = vmul.u32 %v177, 2654435761
        %v193 = vmul.u32 %v178, 2654435761
        %v194 = vmul.u32 %v179, 2654435761
        %v195 = vmul.u32 %v184, 2246822519
        %v196 = vmul.u32 %v185, 2246822519
        %v197 = vadd.s32 %v187, %v195
        %v198 = vadd.s32 %v187, %v196
        %v199 = vadd.s32 %v188, %v195
        %v200 = vadd.s32 %v188, %v196
        %v201 = vadd.s32 %v189, %v195
        %v202 = vadd.s32 %v189, %v196
        %v203 = vadd.s32 %v190, %v195
        %v204 = vadd.s32 %v190, %v196
        %v205 = vadd.s32 %v191, %v195
        %v206 = vadd.s32 %v191, %v196
        %v207 = vadd.s32 %v192, %v195
        %v208 = vadd.s32 %v192, %v196
        %v209 = vadd.s32 %v193, %v195
        %v210 = vadd.s32 %v193, %v196
        %v211 = vadd.s32 %v194, %v195
        %v212 = vadd.s32 %v194, %v196
        %s213 = smul.u32 %s186, 668265263
        %v214 = vstv %s213
        %v215 = vxor.u32 %v197, %v214
        %v216 = vxor.u32 %v198, %v214
        %v217 = vxor.u32 %v199, %v214
        %v218 = vxor.u32 %v200, %v214
        %v219 = vxor.u32 %v201, %v214
        %v220 = vxor.u32 %v202, %v214
        %v221 = vxor.u32 %v203, %v214
        %v222 = vxor.u32 %v204, %v214
        %v223 = vxor.u32 %v205, %v214
        %v224 = vxor.u32 %v206, %v214
        %v225 = vxor.u32 %v207, %v214
        %v226 = vxor.u32 %v208, %v214
        %v227 = vxor.u32 %v209, %v214
        %v228 = vxor.u32 %v210, %v214
        %v229 = vxor.u32 %v211, %v214
        %v230 = vxor.u32 %v212, %v214
        %v231 = vshrl.u32 %v215, 16
        %v232 = vshrl.u32 %v216, 16
        %v233 = vshrl.u32 %v217, 16
        %v234 = vshrl.u32 %v218, 16
        %v235 = vshrl.u32 %v219, 16
        %v236 = vshrl.u32 %v220, 16
        %v237 = vshrl.u32 %v221, 16
        %v238 = vshrl.u32 %v222, 16
        %v239 = vshrl.u32 %v223, 16
        %v240 = vshrl.u32 %v224, 16
        %v241 = vshrl.u32 %v225, 16
        %v242 = vshrl.u32 %v226, 16
        %v243 = vshrl.u32 %v227, 16
        %v244 = vshrl.u32 %v228, 16
        %v245 = vshrl.u32 %v229, 16
        %v246 = vshrl.u32 %v230, 16
        %v247 = vxor.u32 %v215, %v231
        %v248 = vxor.u32 %v216, %v232
        %v249 = vxor.u32 %v217, %v233
        %v250 = vxor.u32 %v218, %v234
        %v251 = vxor.u32 %v219, %v235
        %v252 = vxor.u32 %v220, %v236
        %v253 = vxor.u32 %v221, %v237
        %v254 = vxor.u32 %v222, %v238
        %v255 = vxor.u32 %v223, %v239
        %v256 = vxor.u32 %v224, %v240
        %v257 = vxor.u32 %v225, %v241
        %v258 = vxor.u32 %v226, %v242
        %v259 = vxor.u32 %v227, %v243
        %v260 = vxor.u32 %v228, %v244
        %v261 = vxor.u32 %v229, %v245
        %v262 = vxor.u32 %v230, %v246
        %v263 = vmul.u32 %v247, 2146121005
        %v264 = vmul.u32 %v248, 2146121005
        %v265 = vmul.u32 %v249, 2146121005
        %v266 = vmul.u32 %v250, 2146121005
        %v267 = vmul.u32 %v251, 2146121005
        %v268 = vmul.u32 %v252, 2146121005
        %v269 = vmul.u32 %v253, 2146121005
        %v270 = vmul.u32 %v254, 2146121005
        %v271 = vmul.u32 %v255, 2146121005
        %v272 = vmul.u32 %v256, 2146121005
        %v273 = vmul.u32 %v257, 2146121005
        %v274 = vmul.u32 %v258, 2146121005
        %v275 = vmul.u32 %v259, 2146121005
        %v276 = vmul.u32 %v260, 2146121005
        %v277 = vmul.u32 %v261, 2146121005
        %v278 = vmul.u32 %v262, 2146121005
        %v279 = vshrl.u32 %v263, 15
        %v280 = vshrl.u32 %v264, 15
        %v281 = vshrl.u32 %v265, 15
        %v282 = vshrl.u32 %v266, 15
        %v283 = vshrl.u32 %v267, 15
        %v284 = vshrl.u32 %v268, 15
        %v285 = vshrl.u32 %v269, 15
        %v286 = vshrl.u32 %v270, 15
        %v287 = vshrl.u32 %v271, 15
        %v288 = vshrl.u32 %v272, 15
        %v289 = vshrl.u32 %v273, 15
        %v290 = vshrl.u32 %v274, 15
        %v291 = vshrl.u32 %v275, 15
        %v292 = vshrl.u32 %v276, 15
        %v293 = vshrl.u32 %v277, 15
        %v294 = vshrl.u32 %v278, 15
        %v295 = vxor.u32 %v263, %v279
        %v296 = vxor.u32 %v264, %v280
        %v297 = vxor.u32 %v265, %v281
        %v298 = vxor.u32 %v266, %v282
        %v299 = vxor.u32 %v267, %v283
        %v300 = vxor.u32 %v268, %v284
        %v301 = vxor.u32 %v269, %v285
        %v302 = vxor.u32 %v270, %v286
        %v303 = vxor.u32 %v271, %v287
        %v304 = vxor.u32 %v272, %v288
        %v305 = vxor.u32 %v273, %v289
        %v306 = vxor.u32 %v274, %v290
        %v307 = vxor.u32 %v275, %v291
        %v308 = vxor.u32 %v276, %v292
        %v309 = vxor.u32 %v277, %v293
        %v310 = vxor.u32 %v278, %v294
        %v311 = vmul.u32 %v295, 2221713035
        %v312 = vmul.u32 %v296, 2221713035
        %v313 = vmul.u32 %v297, 2221713035
        %v314 = vmul.u32 %v298, 2221713035
        %v315 = vmul.u32 %v299, 2221713035
        %v316 = vmul.u32 %v300, 2221713035
        %v317 = vmul.u32 %v301, 2221713035
        %v318 = vmul.u32 %v302, 2221713035
        %v319 = vmul.u32 %v303, 2221713035
        %v320 = vmul.u32 %v304, 2221713035
        %v321 = vmul.u32 %v305, 2221713035
        %v322 = vmul.u32 %v306, 2221713035
        %v323 = vmul.u32 %v307, 2221713035
        %v324 = vmul.u32 %v308, 2221713035
        %v325 = vmul.u32 %v309, 2221713035
        %v326 = vmul.u32 %v310, 2221713035
        %v327 = vshrl.u32 %v311, 16
        %v328 = vshrl.u32 %v312, 16
        %v329 = vshrl.u32 %v313, 16
        %v330 = vshrl.u32 %v314, 16
        %v331 = vshrl.u32 %v315, 16
        %v332 = vshrl.u32 %v316, 16
        %v333 = vshrl.u32 %v317, 16
        %v334 = vshrl.u32 %v318, 16
        %v335 = vshrl.u32 %v319, 16
        %v336 = vshrl.u32 %v320, 16
        %v337 = vshrl.u32 %v321, 16
        %v338 = vshrl.u32 %v322, 16
        %v339 = vshrl.u32 %v323, 16
        %v340 = vshrl.u32 %v324, 16
        %v341 = vshrl.u32 %v325, 16
        %v342 = vshrl.u32 %v326, 16
        %v343 = vxor.u32 %v311, %v327
        %v344 = vxor.u32 %v312, %v328
        %v345 = vxor.u32 %v313, %v329
        %v346 = vxor.u32 %v314, %v330
        %v347 = vxor.u32 %v315, %v331
        %v348 = vxor.u32 %v316, %v332
        %v349 = vxor.u32 %v317, %v333
        %v350 = vxor.u32 %v318, %v334
        %v351 = vxor.u32 %v319, %v335
        %v352 = vxor.u32 %v320, %v336
        %v353 = vxor.u32 %v321, %v337
        %v354 = vxor.u32 %v322, %v338
        %v355 = vxor.u32 %v323, %v339
        %v356 = vxor.u32 %v324, %v340
        %v357 = vxor.u32 %v325, %v341
        %v358 = vxor.u32 %v326, %v342
        %v359 = vshrl.u32 %v343, 9
        %v360 = vshrl.u32 %v344, 9
        %v361 = vshrl.u32 %v345, 9
        %v362 = vshrl.u32 %v346, 9
        %v363 = vshrl.u32 %v347, 9
        %v364 = vshrl.u32 %v348, 9
        %v365 = vshrl.u32 %v349, 9
        %v366 = vshrl.u32 %v350, 9
        %v367 = vshrl.u32 %v351, 9
        %v368 = vshrl.u32 %v352, 9
        %v369 = vshrl.u32 %v353, 9
        %v370 = vshrl.u32 %v354, 9
        %v371 = vshrl.u32 %v355, 9
        %v372 = vshrl.u32 %v356, 9
        %v373 = vshrl.u32 %v357, 9
        %v374 = vshrl.u32 %v358, 9
        %vm375 = vcmp.ge.u32.totalorder %v359, 4194304
        %vm376 = vcmp.ge.u32.totalorder %v360, 4194304
        %vm377 = vcmp.ge.u32.totalorder %v361, 4194304
        %vm378 = vcmp.ge.u32.totalorder %v362, 4194304
        %vm379 = vcmp.ge.u32.totalorder %v363, 4194304
        %vm380 = vcmp.ge.u32.totalorder %v364, 4194304
        %vm381 = vcmp.ge.u32.totalorder %v365, 4194304
        %vm382 = vcmp.ge.u32.totalorder %v366, 4194304
        %vm383 = vcmp.ge.u32.totalorder %v367, 4194304
        %vm384 = vcmp.ge.u32.totalorder %v368, 4194304
        %vm385 = vcmp.ge.u32.totalorder %v369, 4194304
        %vm386 = vcmp.ge.u32.totalorder %v370, 4194304
        %vm387 = vcmp.ge.u32.totalorder %v371, 4194304
        %vm388 = vcmp.ge.u32.totalorder %v372, 4194304
        %vm389 = vcmp.ge.u32.totalorder %v373, 4194304
        %vm390 = vcmp.ge.u32.totalorder %v374, 4194304
        %v391 = vld [vmem:[%s137] sm:$0xff]
        %v392 = vld [vmem:[%s137 + $0x8] sm:$0xff]
        %v393 = vld [vmem:[%s137 + $0x10] sm:$0xff]
        %v394 = vld [vmem:[%s137 + $0x18] sm:$0xff]
        %v395 = vld [vmem:[%s137 + $0x20] sm:$0xff]
        %v396 = vld [vmem:[%s137 + $0x28] sm:$0xff]
        %v397 = vld [vmem:[%s137 + $0x30] sm:$0xff]
        %v398 = vld [vmem:[%s137 + $0x38] sm:$0xff]
        %v399 = vld [vmem:[%s137 + $0x40] sm:$0xff]
        %v400 = vld [vmem:[%s137 + $0x48] sm:$0xff]
        %v401 = vld [vmem:[%s137 + $0x50] sm:$0xff]
        %v402 = vld [vmem:[%s137 + $0x58] sm:$0xff]
        %v403 = vld [vmem:[%s137 + $0x60] sm:$0xff]
        %v404 = vld [vmem:[%s137 + $0x68] sm:$0xff]
        %v405 = vld [vmem:[%s137 + $0x70] sm:$0xff]
        %v406 = vld [vmem:[%s137 + $0x78] sm:$0xff]
        %v407 = vmul.f32 %v391, 2.0
        %v408 = vmul.f32 %v392, 2.0
        %v409 = vmul.f32 %v393, 2.0
        %v410 = vmul.f32 %v394, 2.0
        %v411 = vmul.f32 %v395, 2.0
        %v412 = vmul.f32 %v396, 2.0
        %v413 = vmul.f32 %v397, 2.0
        %v414 = vmul.f32 %v398, 2.0
        %v415 = vmul.f32 %v399, 2.0
        %v416 = vmul.f32 %v400, 2.0
        %v417 = vmul.f32 %v401, 2.0
        %v418 = vmul.f32 %v402, 2.0
        %v419 = vmul.f32 %v403, 2.0
        %v420 = vmul.f32 %v404, 2.0
        %v421 = vmul.f32 %v405, 2.0
        %v422 = vmul.f32 %v406, 2.0
        %v423 = vsel %vm375, %v407, 0.0
        %v424 = vsel %vm376, %v408, 0.0
        %v425 = vsel %vm377, %v409, 0.0
        %v426 = vsel %vm378, %v410, 0.0
        %v427 = vsel %vm379, %v411, 0.0
        %v428 = vsel %vm380, %v412, 0.0
        %v429 = vsel %vm381, %v413, 0.0
        %v430 = vsel %vm382, %v414, 0.0
        %v431 = vsel %vm383, %v415, 0.0
        %v432 = vsel %vm384, %v416, 0.0
        %v433 = vsel %vm385, %v417, 0.0
        %v434 = vsel %vm386, %v418, 0.0
        %v435 = vsel %vm387, %v419, 0.0
        %v436 = vsel %vm388, %v420, 0.0
        %v437 = vsel %vm389, %v421, 0.0
        %v438 = vsel %vm390, %v422, 0.0
        %439 = vst [vmem:[%s155] sm:$0xff] %v423
        %440 = vst [vmem:[%s155 + $0x8] sm:$0xff] %v424
        %441 = vst [vmem:[%s155 + $0x10] sm:$0xff] %v425
        %442 = vst [vmem:[%s155 + $0x18] sm:$0xff] %v426
        %443 = vst [vmem:[%s155 + $0x20] sm:$0xff] %v427
        %444 = vst [vmem:[%s155 + $0x28] sm:$0xff] %v428
        %445 = vst [vmem:[%s155 + $0x30] sm:$0xff] %v429
        %446 = vst [vmem:[%s155 + $0x38] sm:$0xff] %v430
        %447 = vst [vmem:[%s155 + $0x40] sm:$0xff] %v431
        %448 = vst [vmem:[%s155 + $0x48] sm:$0xff] %v432
        %449 = vst [vmem:[%s155 + $0x50] sm:$0xff] %v433
        %450 = vst [vmem:[%s155 + $0x58] sm:$0xff] %v434
        %451 = vst [vmem:[%s155 + $0x60] sm:$0xff] %v435
        %452 = vst [vmem:[%s155 + $0x68] sm:$0xff] %v436
        %453 = vst [vmem:[%s155 + $0x70] sm:$0xff] %v437
        %454 = vst [vmem:[%s155 + $0x78] sm:$0xff] %v438
        %s455 = sand.u32 %s70, 1
        %s456 = scalar_lea.sflag [#allocation6], %s455
        %s457 = sand.u32 %s70, 1
        %s458 = smul.addr %s457, 128
        %s459 = scalar_lea.vmem [#allocation7], %s458
        // Predicated region
        $region29: #{tpu_custom_call.1} parent=23 // pred_check
          %p460 = pneg %p80
        $region30: #{tpu_custom_call.1} parent=23 // pred_check_branch
          %462 = sbr.rel (%p460) target = $region32
        $region31: #{tpu_custom_call.1} parent=23 // pred_region
          %s463 = smul.u32 8, %s24
          %s464 = smul.u32 2, %s25
          %s466 = ssub.s32 2048, 2048
          %467 = vsyncadd %s456, %s466
          %s468 = smul.addr %s463, 2
          %s469 = sadd.s32 %s464, %s468
          %s470 = smul.addr %s469, 128
          %s471 = scalar_lea.hbm %s2, %s470
          %s472 = sshll.u32 %s459, 4
          %s473 = int_to_ptr.vmem [resolvable:$true] %s472
          %478 = dma.vmem_to_hbm [thread:$0]  %s473, 2048, %s471, %s456, 256, 256, 16
        $region32: #{tpu_custom_call.1} parent=23 // pred_fallthru
          _
      $region24: #{tpu_custom_call.1} parent=5 // pred_fallthru
        _
      %p479 = scmp.le.s32.totalorder 2, %s15
      // Predicated region
      $region33: #{tpu_custom_call.1} parent=5 // pred_check
        %p480 = pneg %p479
      $region34: #{tpu_custom_call.1} parent=5 // pred_check_branch
        %482 = sbr.rel (%p480) target = $region36
      $region35: #{tpu_custom_call.1} parent=5 // pred_region
        %s483 = ssub.s32 %s15, 2
        // Predicated region
        $region37: #{tpu_custom_call.1} parent=35 // pred_check
          %p484 = pneg %p86
        $region38: #{tpu_custom_call.1} parent=35 // pred_check_branch
          %486 = sbr.rel (%p484) target = $region40
        $region39: #{tpu_custom_call.1} parent=35 // pred_region
          %s487 = sand.u32 %s71, 1
          %s488 = scalar_lea.sflag [#allocation6], %s487
          %s489 = sand.u32 %s71, 1
          %s490 = smul.addr %s489, 128
          %s491 = scalar_lea.vmem [#allocation7], %s490
          %492 = dma.done %s488, 2048
        $region40: #{tpu_custom_call.1} parent=35 // pred_fallthru
          _
      $region36: #{tpu_custom_call.1} parent=5 // pred_fallthru
        _
    $region6: #{tpu_custom_call.1} parent=1 // loop_footer
      %s19 = sadd.s32 1, %s15
    $region7: #{tpu_custom_call.1} parent=1 // loop_footer_branch
      %14 = sbr.rel target = $region3
    $region8: #{tpu_custom_call.1} parent=1 // loop_exit
      _
    %493 = vsyncpa [#allocation5], 1
    %s494 = scalar_lea.sflag [#allocation5], 1
    %495 = vsyncpa %s494, 1
    %496 = vsyncpa [#allocation6], 1
    %s497 = scalar_lea.sflag [#allocation6], 1
    %498 = vsyncpa %s497, 1

</llo_original>
